<compile_context>
chip_gen: v7x
topology: tpu7x:2x2x1
jax: 0.10.0
libtpu: 0.0.40
codegen_flags: <defaults>
</compile_context>

<pallas_src>
import jax
import jax.numpy as jnp
from jax import lax
from jax.experimental import pallas as pl
from jax.experimental.pallas import tpu as pltpu


def _round_up(x, m):
    return ((x + m - 1) // m) * m


def _vq_kernel(x_ref, cb_ref, cbsq_ref, idx_ref):
    # x_ref:    (1, D, T)  channels-first activation tile of one batch
    # cb_ref:   (K, D)     full codebook (resident; constant index map)
    # cbsq_ref: (K, 1)     precomputed ||codebook_k||^2
    # idx_ref:  (1, 1, T)  int32 nearest-code index per spatial position
    x = x_ref[0].astype(jnp.float32)        # (D, T)
    cb = cb_ref[...].astype(jnp.float32)    # (K, D)

    # dots[k, t] = <codebook_k, x_t>; contract the D axis of both (MXU matmul).
    dots = lax.dot_general(
        cb, x,
        dimension_numbers=(((1,), (0,)), ((), ())),
        preferred_element_type=jnp.float32,
    )                                        # (K, T)

    # ||x||^2 is constant per column, so it cannot change the argmin over K;
    # drop it (saves a D-reduction, a multiply and a broadcast-add per tile).
    dist = cbsq_ref[...] - 2.0 * dots        # (K, T)

    # First-minimum argmin over the K (sublane) axis using only 2-D reductions
    # (matches torch.min's first-minimal-index tie-breaking).
    k = dist.shape[0]
    row_ids = lax.broadcasted_iota(jnp.int32, dist.shape, 0)        # (K, T)
    min_d = jnp.min(dist, axis=0, keepdims=True)                    # (1, T)
    idx = jnp.min(jnp.where(dist == min_d, row_ids, k),
                  axis=0, keepdims=True)                            # (1, T)
    idx_ref[0] = idx.astype(jnp.int32)


def vq_indices(z_e_x, codebook, *, max_tile_hw=4096):
    """z_e_x: (B, D, H, W); codebook: (K, D) -> int32 indices (B, H, W)."""
    B, D, H, W = z_e_x.shape
    K, D2 = codebook.shape
    assert D == D2
    HW = H * W

    # Metadata-only reshape: H, W are the trailing contiguous axes of NCHW,
    # so this moves no data (the NHWC permute is fused into the kernel).
    x = z_e_x.reshape(B, D, HW)

    # Lane-dense tile along HW: multiple of 128, as large as useful but capped
    # so v7x (half VMEM, 2 TCs) still sees several blocks per core.
    tile_hw = min(_round_up(HW, 128), _round_up(max_tile_hw, 128))
    n_hw_blocks = pl.cdiv(HW, tile_hw)

    # Hoisted out of the per-step work; tiny resident (K, 1) input.
    cb_sqr = jnp.sum(codebook.astype(jnp.float32) ** 2, axis=1, keepdims=True)

    idx = pl.pallas_call(
        _vq_kernel,
        out_shape=jax.ShapeDtypeStruct((B, 1, HW), jnp.int32),
        grid_spec=pl.GridSpec(
            grid=(B, n_hw_blocks),
            in_specs=[
                pl.BlockSpec((1, D, tile_hw), lambda b, j: (b, 0, j)),
                pl.BlockSpec((K, D), lambda b, j: (0, 0)),
                pl.BlockSpec((K, 1), lambda b, j: (0, 0)),
            ],
            out_specs=pl.BlockSpec((1, 1, tile_hw), lambda b, j: (b, 0, j)),
        ),
        compiler_params=pltpu.CompilerParams(
            # Both grid axes are independent -> shard across v7x's dual TCs.
            dimension_semantics=("parallel", "parallel"),
            # Headroom for large tiles on v5e (16 MiB default scoped VMEM);
            # still within the scoped/physical budget on v6e/v7x.
            vmem_limit_bytes=32 * 1024 * 1024,
        ),
    )(x, codebook, cb_sqr)

    return idx.reshape(B, H, W)


class VQEmbedding:
    """JAX/Pallas port of the PyTorch VQEmbedding module's forward pass."""

    def __init__(self, K, D, key):
        self.K = K
        self.D = D
        # nn.Embedding(K, D).weight.data.uniform_(-1/K, 1/K)
        self.embedding_weight = jax.random.uniform(
            key, (K, D), dtype=jnp.float32, minval=-1.0 / K, maxval=1.0 / K
        )

    def forward(self, z_e_x):
        # z_e_x: (B, D, H, W) -> latents: (B, H, W) int32
        return vq_indices(z_e_x, self.embedding_weight)

    # TODO(synk): straight_through (codebook gather + straight-through estimator
    # gradients) is an autograd construct; only the forward index lookup is here.


def _reference_indices(z_e_x, codebook):
    # Pure-JAX mirror of the torch implementation (permute -> flatten -> addmm).
    B, D, H, W = z_e_x.shape
    x = jnp.transpose(z_e_x, (0, 2, 3, 1)).reshape(-1, D).astype(jnp.float32)
    cb = codebook.astype(jnp.float32)
    dist = (
        jnp.sum(x * x, axis=1, keepdims=True)
        + jnp.sum(cb * cb, axis=1)[None, :]
        - 2.0 * x @ cb.T
    )
    return jnp.argmin(dist, axis=1).astype(jnp.int32).reshape(B, H, W)


if __name__ == "__main__":
    key = jax.random.PRNGKey(0)
    k_w, k_x = jax.random.split(key)

    K, D = 32, 16          # codebook size, embedding dim
    B, H, W = 2, 16, 16    # NCHW input (2, 16, 16, 16) -> 512 positions

    module = VQEmbedding(K, D, k_w)
    z_e_x = jax.random.normal(k_x, (B, D, H, W), dtype=jnp.float32)

    latents = module.forward(z_e_x)
    latents = jax.block_until_ready(latents)

    ref = _reference_indices(z_e_x, module.embedding_weight)
    assert latents.shape == (B, H, W)
    assert latents.dtype == jnp.int32
    assert bool(jnp.all(latents == ref))

    print("KERNEL_OK")
</pallas_src>

<mosaic_0001>
module attributes {stable_mosaic.version = 11 : i64} {
  func.func @_vq_kernel(%arg0: i32, %arg1: i32, %arg2: memref<1x16x256xf32, #tpu.memory_space<vmem>>, %arg3: memref<32x16xf32, #tpu.memory_space<vmem>>, %arg4: memref<32x1xf32, #tpu.memory_space<vmem>>, %arg5: memref<1x1x256xi32, #tpu.memory_space<vmem>>) attributes {dimension_semantics = [#tpu.dimension_semantics<parallel>, #tpu.dimension_semantics<parallel>], iteration_bounds = array<i64: 2, 1>, scalar_prefetch = 0 : i64, scratch_operands = 0 : i64, tpu.core_type = #tpu.core_type<tc>, window_params = [{transform_indices = @transform_0, window_bounds = array<i64: 1, 16, 256>}, {pipeline_mode = #tpu.pipeline_mode<synchronous>, transform_indices = @transform_1, window_bounds = array<i64: 32, 16>}, {pipeline_mode = #tpu.pipeline_mode<synchronous>, transform_indices = @transform_2, window_bounds = array<i64: 32, 1>}, {transform_indices = @transform_3, window_bounds = array<i64: 1, 1, 256>}]} {
    %c0 = arith.constant 0 : index
    %c0_0 = arith.constant 0 : index
    %c0_1 = arith.constant 0 : index
    %0 = vector.load %arg2[%c0, %c0_0, %c0_1] : memref<1x16x256xf32, #tpu.memory_space<vmem>>, vector<1x16x256xf32>
    %1 = vector.shape_cast %0 : vector<1x16x256xf32> to vector<16x256xf32>
    %c0_2 = arith.constant 0 : index
    %c0_3 = arith.constant 0 : index
    %2 = vector.load %arg3[%c0_2, %c0_3] : memref<32x16xf32, #tpu.memory_space<vmem>>, vector<32x16xf32>
    %cst = arith.constant dense<0.000000e+00> : vector<32x256xf32>
    %3 = tpu.matmul %2, %1, %cst {dimension_numbers = #tpu.dot_dimension_numbers<[1], [0], [0], [1], [0, 0, 1, 1], [], []>} : vector<32x16xf32>, vector<16x256xf32>, vector<32x256xf32> -> vector<32x256xf32>
    %c0_4 = arith.constant 0 : index
    %c0_5 = arith.constant 0 : index
    %4 = vector.load %arg4[%c0_4, %c0_5] : memref<32x1xf32, #tpu.memory_space<vmem>>, vector<32x1xf32>
    %cst_6 = arith.constant 2.000000e+00 : f32
    %5 = vector.broadcast %cst_6 : f32 to vector<32x256xf32>
    %6 = arith.mulf %5, %3 : vector<32x256xf32>
    %7 = vector.broadcast %4 : vector<32x1xf32> to vector<32x256xf32>
    %8 = arith.subf %7, %6 : vector<32x256xf32>
    %9 = tpu.iota {dimensions = array<i32: 0>} : vector<32x256xi32>
    %cst_7 = arith.constant dense<0x7F800000> : vector<256xf32>
    %10 = vector.multi_reduction <minimumf>, %8, %cst_7 [0] : vector<32x256xf32> to vector<256xf32>
    %11 = vector.shape_cast %10 : vector<256xf32> to vector<1x256xf32>
    %12 = vector.broadcast %11 : vector<1x256xf32> to vector<32x256xf32>
    %13 = arith.cmpf oeq, %8, %12 : vector<32x256xf32>
    %c32_i32 = arith.constant 32 : i32
    %14 = vector.broadcast %c32_i32 : i32 to vector<32x256xi32>
    %15 = arith.select %13, %9, %14 : vector<32x256xi1>, vector<32x256xi32>
    %cst_8 = arith.constant dense<2147483647> : vector<256xi32>
    %16 = vector.multi_reduction <minsi>, %15, %cst_8 [0] : vector<32x256xi32> to vector<256xi32>
    %17 = vector.shape_cast %16 : vector<256xi32> to vector<1x256xi32>
    %c0_9 = arith.constant 0 : index
    %c0_10 = arith.constant 0 : index
    %c0_11 = arith.constant 0 : index
    %18 = vector.load %arg5[%c0_9, %c0_10, %c0_11] : memref<1x1x256xi32, #tpu.memory_space<vmem>>, vector<1x1x256xi32>
    %19 = vector.shape_cast %18 : vector<1x1x256xi32> to vector<1x256xi32>
    %20 = vector.shape_cast %17 : vector<1x256xi32> to vector<1x1x256xi32>
    tpu.vector_store %arg5[%c0_9, %c0_10, %c0_11], %20 {strides = array<i32>} : memref<1x1x256xi32, #tpu.memory_space<vmem>>, vector<1x1x256xi32>,
    return
  }
  func.func @transform_0(%arg0: i32, %arg1: i32) -> (i32, i32, i32) {
    %c0_i32 = arith.constant 0 : i32
    %c0_i32_0 = arith.constant 0 : i32
    return %arg0, %c0_i32, %arg1 : i32, i32, i32
  }
  func.func @transform_1(%arg0: i32, %arg1: i32) -> (i32, i32) {
    %c0_i32 = arith.constant 0 : i32
    %c0_i32_0 = arith.constant 0 : i32
    %c0_i32_1 = arith.constant 0 : i32
    return %c0_i32, %c0_i32_0 : i32, i32
  }
  func.func @transform_2(%arg0: i32, %arg1: i32) -> (i32, i32) {
    %c0_i32 = arith.constant 0 : i32
    %c0_i32_0 = arith.constant 0 : i32
    %c0_i32_1 = arith.constant 0 : i32
    return %c0_i32, %c0_i32_0 : i32, i32
  }
  func.func @transform_3(%arg0: i32, %arg1: i32) -> (i32, i32, i32) {
    %c0_i32 = arith.constant 0 : i32
    %c0_i32_0 = arith.constant 0 : i32
    return %arg0, %c0_i32, %arg1 : i32, i32, i32
  }
}

</mosaic_0001>

<llo_original>
// kernel: tpu_custom_call.1
$region0: #{tpu_custom_call.1}
  #allocation0 [shape = 'u32[]', space=smem, size = 0x4, offset = 0x4, fixed_abs, tag = 'smem constant byte address 0x4 - core index']
  #allocation1 [shape = 'u32[144,128]{1,0:T(1,128)}', space=vmem, size = 0x12000, scoped, tag = 'internal scratch']
  %s0 = inlined_call_operand.vmem [shape: f32[2,16,256], index: 0, kind: input, shape index: {}]
  %s1 = inlined_call_operand.vmem [shape: f32[32,16], index: 1, kind: input, shape index: {}]
  %s2 = inlined_call_operand.vmem [shape: f32[32,1], index: 2, kind: input, shape index: {}]
  %s3 = inlined_call_operand.hbm [shape: s32[2,1,256], index: 3, kind: output, shape index: {}]
  %s4 = sld [smem:[#allocation0]]
  $region45: #{tpu_custom_call.1} parent=0
    _
  %s6 = ssub.s32 1, %s4
  %s7 = scalar_select 0, %s6, %s4
  $region1: #{tpu_custom_call.1} parent=0
    #allocation2 [shape = 'u8[2048]{0}', space=vmem, size = 0x800, scoped, tag = 'output window, operand 0']
    #allocation3 [shape = 's32[2]{0}', space=sflag, size = 0x8, scoped, tag = 'scoped memory for tpu_custom_call.1']
    %8 = vsyncpa [#allocation3], 0
    %s9 = scalar_lea.sflag [#allocation3], 1
    %10 = vsyncpa %s9, 0
    loop: start=0, step=1, limit=4
    $region2: #{tpu_custom_call.1} parent=1 // loop_pre_header
      _
    $region3: #{tpu_custom_call.1} parent=1 // loop_header
      %s12 = sphi 0, %s16
      %p13 = scmp.ge.s32.totalorder %s12, 4
      %s19 = sphi 0, %s31
      %s20 = sphi 0, %s27
      %s21 = sphi 0, %s19
      %s22 = sphi 0, %s20
      %s23 = sphi 0, %s21
      %s24 = sphi 0, %s22
      %s36 = sphi 0, %s38
      %s39 = sphi 0, %s36
      %s40 = sphi 0, %s39
      %s56 = sphi 0, %s40
      %s60 = sphi 0, %s60
      %s62 = sphi 0, %s60
      %s63 = sphi 0, %s62
      %s77 = sphi 0, %s63
      %s81 = sphi 0, %s81
      %s83 = sphi 0, %s81
      %s84 = sphi 0, %s83
      %s98 = sphi 0, %s84
      %s106 = sphi 0, %s108
      %s109 = sphi 0, %s106
      %s110 = sphi 0, %s109
      %s126 = sphi 0, %s110
    $region4: #{tpu_custom_call.1} parent=1 // loop_header_branch
      %15 = sbr.rel (%p13) target = $region8
    $region5: #{tpu_custom_call.1} parent=1 // loop_body
      %s17 = ssub.s32 %s12, 1
      %s18 = ssub.s32 %s12, 2
      %s25 = sadd.s32 1, %s20
      %p26 = scmp.ge.s32.totalorder %s25, 1
      %s27 = scalar_select %p26, 0, %s25
      %s28 = sadd.s32 1, %s19
      %s29 = scalar_select %p26, %s28, %s19
      %p30 = scmp.ge.s32.totalorder %s29, 2
      %s31 = scalar_select %p30, 0, %s29
      %s32 = ssub.s32 %s19, %s31
      %s33 = ssub.s32 %s20, %s27
      %s34 = sor.u32 %s32, %s33
      %p35 = scmp.eq.s32.totalorder %s34, 0
      %s37 = sadd.s32 %s36, 1
      %s38 = scalar_select %p35, %s36, %s37
      %p41 = pneg %p35
      %p42 = scmp.eq.s32.totalorder %s12, 1
      %p43 = por %p41, %p42
      %p44 = scmp.ne.s32.totalorder %s36, %s39
      %p45 = scmp.eq.s32.totalorder %s12, 0
      %p46 = por %p44, %p45
      %p47 = scmp.ne.s32.totalorder %s36, %s39
      %p48 = scmp.eq.s32.totalorder %s17, 1
      %p49 = por %p47, %p48
      %p50 = scmp.ne.s32.totalorder %s39, %s40
      %p51 = scmp.eq.s32.totalorder %s17, 0
      %p52 = por %p50, %p51
      %p53 = scmp.ne.s32.totalorder %s39, %s40
      %p54 = scmp.eq.s32.totalorder %s18, 1
      %p55 = por %p53, %p54
      %p57 = scmp.ne.s32.totalorder %s40, %s56
      %p58 = scmp.eq.s32.totalorder %s18, 0
      %p59 = por %p57, %p58
      %s61 = sadd.s32 %s60, 1
      %p64 = scmp.eq.s32.totalorder %s12, 1
      %p65 = scmp.ne.s32.totalorder %s60, %s62
      %p66 = scmp.eq.s32.totalorder %s12, 0
      %p67 = por %p65, %p66
      %p68 = scmp.ne.s32.totalorder %s60, %s62
      %p69 = scmp.eq.s32.totalorder %s17, 1
      %p70 = por %p68, %p69
      %p71 = scmp.ne.s32.totalorder %s62, %s63
      %p72 = scmp.eq.s32.totalorder %s17, 0
      %p73 = por %p71, %p72
      %p74 = scmp.ne.s32.totalorder %s62, %s63
      %p75 = scmp.eq.s32.totalorder %s18, 1
      %p76 = por %p74, %p75
      %p78 = scmp.ne.s32.totalorder %s63, %s77
      %p79 = scmp.eq.s32.totalorder %s18, 0
      %p80 = por %p78, %p79
      %s82 = sadd.s32 %s81, 1
      %p85 = scmp.eq.s32.totalorder %s12, 1
      %p86 = scmp.ne.s32.totalorder %s81, %s83
      %p87 = scmp.eq.s32.totalorder %s12, 0
      %p88 = por %p86, %p87
      %p89 = scmp.ne.s32.totalorder %s81, %s83
      %p90 = scmp.eq.s32.totalorder %s17, 1
      %p91 = por %p89, %p90
      %p92 = scmp.ne.s32.totalorder %s83, %s84
      %p93 = scmp.eq.s32.totalorder %s17, 0
      %p94 = por %p92, %p93
      %p95 = scmp.ne.s32.totalorder %s83, %s84
      %p96 = scmp.eq.s32.totalorder %s18, 1
      %p97 = por %p95, %p96
      %p99 = scmp.ne.s32.totalorder %s84, %s98
      %p100 = scmp.eq.s32.totalorder %s18, 0
      %p101 = por %p99, %p100
      %s102 = ssub.s32 %s19, %s31
      %s103 = ssub.s32 %s20, %s27
      %s104 = sor.u32 %s102, %s103
      %p105 = scmp.eq.s32.totalorder %s104, 0
      %s107 = sadd.s32 %s106, 1
      %s108 = scalar_select %p105, %s106, %s107
      %p111 = pneg %p105
      %p112 = scmp.eq.s32.totalorder %s12, 1
      %p113 = por %p111, %p112
      %p114 = scmp.ne.s32.totalorder %s106, %s109
      %p115 = scmp.eq.s32.totalorder %s12, 0
      %p116 = por %p114, %p115
      %p117 = scmp.ne.s32.totalorder %s106, %s109
      %p118 = scmp.eq.s32.totalorder %s17, 1
      %p119 = por %p117, %p118
      %p120 = scmp.ne.s32.totalorder %s109, %s110
      %p121 = scmp.eq.s32.totalorder %s17, 0
      %p122 = por %p120, %p121
      %p123 = scmp.ne.s32.totalorder %s109, %s110
      %p124 = scmp.eq.s32.totalorder %s18, 1
      %p125 = por %p123, %p124
      %p127 = scmp.ne.s32.totalorder %s110, %s126
      %p128 = scmp.eq.s32.totalorder %s18, 0
      %p129 = por %p127, %p128
      %p130 = scmp.le.s32.totalorder 1, %s12
      %p131 = scmp.lt.s32.totalorder %s12, 3
      %p132 = pnand %p130, %p131
      %p133 = pneg %p132
      // Predicated region
      $region9: #{tpu_custom_call.1} parent=5 // pred_check
        _
      $region10: #{tpu_custom_call.1} parent=5 // pred_check_branch
        %135 = sbr.rel (%p132) target = $region12
      $region11: #{tpu_custom_call.1} parent=5 // pred_region
        %s136 = ssub.s32 %s12, 1
        // Predicated region
        $region13: #{tpu_custom_call.1} parent=11 // pred_check
          %p137 = pneg %p73
        $region14: #{tpu_custom_call.1} parent=11 // pred_check_branch
          %139 = sbr.rel (%p137) target = $region16
        $region15: #{tpu_custom_call.1} parent=11 // pred_region
          _
        $region16: #{tpu_custom_call.1} parent=11 // pred_fallthru
          _
        // Predicated region
        $region17: #{tpu_custom_call.1} parent=11 // pred_check
          %p140 = pneg %p94
        $region18: #{tpu_custom_call.1} parent=11 // pred_check_branch
          %142 = sbr.rel (%p140) target = $region20
        $region19: #{tpu_custom_call.1} parent=11 // pred_region
          _
        $region20: #{tpu_custom_call.1} parent=11 // pred_fallthru
          _
      $region12: #{tpu_custom_call.1} parent=5 // pred_fallthru
        _
      %p143 = scmp.lt.s32.totalorder %s12, 2
      // Predicated region
      $region21: #{tpu_custom_call.1} parent=5 // pred_check
        %p144 = pneg %p143
      $region22: #{tpu_custom_call.1} parent=5 // pred_check_branch
        %146 = sbr.rel (%p144) target = $region24
      $region23: #{tpu_custom_call.1} parent=5 // pred_region
        // Predicated region
        $region25: #{tpu_custom_call.1} parent=23 // pred_check
          %p147 = pneg %p46
        $region26: #{tpu_custom_call.1} parent=23 // pred_check_branch
          %149 = sbr.rel (%p147) target = $region28
        $region27: #{tpu_custom_call.1} parent=23 // pred_region
          %s150 = smul.u32 2, %s20
          %p151 = scmp.lt.s32.totalorder %s19, 1
          %s152 = scalar_select %p151, %s19, 1
          %p153 = scmp.lt.s32.totalorder %s150, 1
          %s154 = scalar_select %p153, %s150, 1
          %s155 = smul.addr %s152, 4
          %s156 = sadd.s32 %s154, %s155
          %s157 = smul.addr %s156, 8
          %s158 = scalar_lea.vmem %s0, %s157
          %s159 = smul.u32 2, %s20
        $region28: #{tpu_custom_call.1} parent=23 // pred_fallthru
          _
      $region24: #{tpu_custom_call.1} parent=5 // pred_fallthru
        _
      %p160 = scmp.le.s32.totalorder 1, %s12
      %p161 = scmp.lt.s32.totalorder %s12, 3
      %p162 = pnand %p160, %p161
      %p163 = pneg %p162
      // Predicated region
      $region29: #{tpu_custom_call.1} parent=5 // pred_check
        _
      $region30: #{tpu_custom_call.1} parent=5 // pred_check_branch
        %165 = sbr.rel (%p162) target = $region32
      $region31: #{tpu_custom_call.1} parent=5 // pred_region
        %s166 = ssub.s32 %s12, 1
        %s167 = smul.u32 2, %s22
        %p168 = scmp.lt.s32.totalorder %s21, 1
        %s169 = scalar_select %p168, %s21, 1
        %p170 = scmp.lt.s32.totalorder %s167, 1
        %s171 = scalar_select %p170, %s167, 1
        %s172 = smul.addr %s169, 4
        %s173 = sadd.s32 %s171, %s172
        %s174 = smul.addr %s173, 8
        %s175 = scalar_lea.vmem %s0, %s174
        %p176 = pneg %p52
        %p177 = pneg %p49
        %p178 = pneg %p73
        %p179 = pneg %p70
        %p180 = pneg %p94
        %p181 = pneg %p91
        %p182 = pneg %p122
        %p183 = pneg %p119
        %s184 = sand.u32 %s109, 1
        %s185 = scalar_lea.sflag [#allocation3], %s184
        %s186 = sand.u32 %s109, 1
        %s187 = smul.addr %s186, 2
        %s188 = scalar_lea.vmem [#allocation2], %s187
        %s189 = smul.u32 2, %s22
        %p190 = scmp.lt.s32.totalorder %s21, 1
        %s191 = scalar_select %p190, %s21, 1
        %p192 = scmp.lt.s32.totalorder %s189, 1
        %s193 = scalar_select %p192, %s189, 1
        %s194 = smul.addr %s191, 4
        %s195 = sadd.s32 %s193, %s194
        %s196 = smul.addr %s195, 8
        %s197 = scalar_lea.vmem %s0, %s196
        %s198 = smul.u32 2, %s22
        %s199 = smul.u32 2, %s22
        %v200 = vld [vmem:[%s197] sm:$0xff]
        %v201 = vld [vmem:[%s197 + $0x8] sm:$0xff]
        %v202 = vld [vmem:[%s197 + $0x10] sm:$0xff]
        %v203 = vld [vmem:[%s197 + $0x18] sm:$0xff]
        %v204 = vld [vmem:[%s1] sm:$0xff]
        %v205 = vld [vmem:[%s1 + $0x8] sm:$0xff]
        %v206 = vld [vmem:[%s1 + $0x10] sm:$0xff]
        %v207 = vld [vmem:[%s1 + $0x18] sm:$0xff]
        %vm208 = vcmask 130048
        %v210 = vsel %vm208, %v204, 0
        %v213 = vsel %vm208, %v205, 0
        %v216 = vsel %vm208, %v206, 0
        %v219 = vsel %vm208, %v207, 0
        %221 = vmatprep.subr.mxu0 %v201
        %222 = vmatpush1.msra.mxu0 %v200
        %223 = vmatprep.subr.mxu0 %v203
        %224 = vmatpush1.msra.mxu0 %v202
        %225 = vmatprep.subr.mxu0 0.0
        %226 = vmatpush1.msra.mxu0 0.0
        %227 = vmatprep.subr.mxu0 0.0
        %228 = vmatpush1.msra.mxu0 0.0
        %229 = vmatprep.subr.mxu0 0.0
        %230 = vmatpush1.msra.mxu0 0.0
        %231 = vmatprep.subr.mxu0 0.0
        %232 = vmatpush1.msra.mxu0 0.0
        %233 = vmatprep.subr.mxu0 0.0
        %234 = vmatpush1.msra.mxu0 0.0
        %235 = vmatprep.subr.mxu0 0.0
        %236 = vmatpush1.msra.mxu0 0.0
        %237 = vmatprep.subr.mxu0 0.0
        %238 = vmatpush1.msra.mxu0 0.0
        %239 = vmatprep.subr.mxu0 0.0
        %240 = vmatpush1.msra.mxu0 0.0
        %241 = vmatprep.subr.mxu0 0.0
        %242 = vmatpush1.msra.mxu0 0.0
        %243 = vmatprep.subr.mxu0 0.0
        %244 = vmatpush1.msra.mxu0 0.0
        %245 = vmatprep.subr.mxu0 0.0
        %246 = vmatpush1.msra.mxu0 0.0
        %247 = vmatprep.subr.mxu0 0.0
        %248 = vmatpush1.msra.mxu0 0.0
        %249 = vmatprep.subr.mxu0 0.0
        %250 = vmatpush1.msra.mxu0 0.0
        %251 = vmatprep.subr.mxu0 0.0
        %252 = vmatpush1.msra.mxu0 0.0
        %253 = vmatprep.subr.mxu0 0.0
        %254 = vmatpush1.msra.mxu0 0.0
        %255 = vmatprep.subr.mxu0 0.0
        %256 = vmatpush1.msra.mxu0 0.0
        %257 = vmatprep.subr.mxu0 0.0
        %258 = vmatpush1.msra.mxu0 0.0
        %259 = vmatprep.subr.mxu0 0.0
        %260 = vmatpush1.msra.mxu0 0.0
        %261 = vmatprep.subr.mxu0 0.0
        %262 = vmatpush1.msra.mxu0 0.0
        %263 = vmatprep.subr.mxu0 0.0
        %264 = vmatpush1.msra.mxu0 0.0
        %265 = vmatprep.subr.mxu0 0.0
        %266 = vmatpush1.msra.mxu0 0.0
        %267 = vmatprep.subr.mxu0 0.0
        %268 = vmatpush1.msra.mxu0 0.0
        %269 = vmatprep.subr.mxu0 0.0
        %270 = vmatpush1.msra.mxu0 0.0
        %271 = vmatprep.subr.mxu0 0.0
        %272 = vmatpush1.msra.mxu0 0.0
        %273 = vmatprep.subr.mxu0 0.0
        %274 = vmatpush1.msra.mxu0 0.0
        %275 = vmatprep.subr.mxu0 0.0
        %276 = vmatpush1.msra.mxu0 0.0
        %277 = vmatprep.subr.mxu0 0.0
        %278 = vmatpush1.msra.mxu0 0.0
        %279 = vmatprep.subr.mxu0 0.0
        %280 = vmatpush1.msra.mxu0 0.0
        %281 = vmatprep.subr.mxu0 0.0
        %282 = vmatpush1.msra.mxu0 0.0
        %283 = vmatprep.subr.mxu0 0.0
        %284 = vmatpush1.msra.mxu0 0.0
        %285 = vmatprep.mubr.f32.mxu0 0.0
        %286 = vmatmul.mubr.f32.gmra.mrb[0].mxu0 %v210
        %v287 = vpop.f32.mrb[0].mxu0
        %v288 = vadd.f32 0.0, %v287
        %v289 = vpop.f32.mrb[0].mxu0
        %v290 = vadd.f32 0.0, %v289
        %291 = vmatprep.mubr.f32.mxu0 0.0
        %292 = vmatmul.mubr.f32.gmra.mrb[0].mxu0 %v213
        %v293 = vpop.f32.mrb[0].mxu0
        %v294 = vadd.f32 0.0, %v293
        %v295 = vpop.f32.mrb[0].mxu0
        %v296 = vadd.f32 0.0, %v295
        %297 = vmatprep.mubr.f32.mxu0 0.0
        %298 = vmatmul.mubr.f32.gmra.mrb[0].mxu0 %v216
        %v299 = vpop.f32.mrb[0].mxu0
        %v300 = vadd.f32 0.0, %v299
        %v301 = vpop.f32.mrb[0].mxu0
        %v302 = vadd.f32 0.0, %v301
        %303 = vmatprep.mubr.f32.mxu0 0.0
        %304 = vmatmul.mubr.f32.gmra.mrb[0].mxu0 %v219
        %v305 = vpop.f32.mrb[0].mxu0
        %v306 = vadd.f32 0.0, %v305
        %v307 = vpop.f32.mrb[0].mxu0
        %v308 = vadd.f32 0.0, %v307
        %309 = vdwg.mxu0
        %v310 = vld [vmem:[%s2] sm:$0xff]
        %v311 = vld [vmem:[%s2 + $0x8] sm:$0xff]
        %v312 = vld [vmem:[%s2 + $0x10] sm:$0xff]
        %v313 = vld [vmem:[%s2 + $0x18] sm:$0xff]
        %v314 = vmul.f32 %v288, 2.0
        %v315 = vmul.f32 %v290, 2.0
        %v316 = vmul.f32 %v294, 2.0
        %v317 = vmul.f32 %v296, 2.0
        %v318 = vmul.f32 %v300, 2.0
        %v319 = vmul.f32 %v302, 2.0
        %v320 = vmul.f32 %v306, 2.0
        %v321 = vmul.f32 %v308, 2.0
        %323 = vset.pattern.permute.xlu0 0
        %324 = vperm.xlu0 %323, %v310
        %v325 = vpop.permute.xlu0 %324
        %328 = vset.pattern.permute.xlu0 0
        %329 = vperm.xlu0 %328, %v311
        %v330 = vpop.permute.xlu0 %329
        %333 = vset.pattern.permute.xlu0 0
        %334 = vperm.xlu0 %333, %v312
        %v335 = vpop.permute.xlu0 %334
        %338 = vset.pattern.permute.xlu0 0
        %339 = vperm.xlu0 %338, %v313
        %v340 = vpop.permute.xlu0 %339
        %v342 = vsub.f32 %v325, %v314
        %v343 = vsub.f32 %v325, %v315
        %v344 = vsub.f32 %v330, %v316
        %v345 = vsub.f32 %v330, %v317
        %v346 = vsub.f32 %v335, %v318
        %v347 = vsub.f32 %v335, %v319
        %v348 = vsub.f32 %v340, %v320
        %v349 = vsub.f32 %v340, %v321
        %v350 = vlaneseq
        %v351 = vshrl.u32 %v350, 7
        %v352 = vadd.s32 %v351, 8
        %v353 = vadd.s32 %v351, 16
        %v354 = vadd.s32 %v351, 24
        %v355 = vmin.f32 %v342, %v346
        %v356 = vmin.f32 %v344, %v348
        %v357 = vmin.f32 %v355, %v356
        %v358 = vrot.slane %v357, 4
        %v359 = vmin.f32 %v357, %v358
        %v360 = vrot.slane %v359, 2
        %v361 = vmin.f32 %v359, %v360
        %v362 = vrot.slane %v361, 1
        %v363 = vmin.f32 %v361, %v362
        %v364 = vmin.f32 %v343, %v347
        %v365 = vmin.f32 %v345, %v349
        %v366 = vmin.f32 %v364, %v365
        %v367 = vrot.slane %v366, 4
        %v368 = vmin.f32 %v366, %v367
        %v369 = vrot.slane %v368, 2
        %v370 = vmin.f32 %v368, %v369
        %v371 = vrot.slane %v370, 1
        %v372 = vmin.f32 %v370, %v371
        %vm373 = vcmp.eq.f32.partialorder %v342, %v363
        %vm374 = vcmp.eq.f32.partialorder %v343, %v372
        %vm375 = vcmp.eq.f32.partialorder %v344, %v363
        %vm376 = vcmp.eq.f32.partialorder %v345, %v372
        %vm377 = vcmp.eq.f32.partialorder %v346, %v363
        %vm378 = vcmp.eq.f32.partialorder %v347, %v372
        %vm379 = vcmp.eq.f32.partialorder %v348, %v363
        %vm380 = vcmp.eq.f32.partialorder %v349, %v372
        %v381 = vsel %vm373, %v351, 32
        %v382 = vsel %vm374, %v351, 32
        %v383 = vsel %vm375, %v352, 32
        %v384 = vsel %vm376, %v352, 32
        %v385 = vsel %vm377, %v353, 32
        %v386 = vsel %vm378, %v353, 32
        %v387 = vsel %vm379, %v354, 32
        %v388 = vsel %vm380, %v354, 32
        %vm389 = vcmp.lt.s32.totalorder %v381, %v385
        %v390 = vsel %vm389, %v381, %v385
        %vm391 = vcmp.lt.s32.totalorder %v383, %v387
        %v392 = vsel %vm391, %v383, %v387
        %vm393 = vcmp.lt.s32.totalorder %v390, %v392
        %v394 = vsel %vm393, %v390, %v392
        %v395 = vrot.slane %v394, 4
        %vm396 = vcmp.lt.s32.totalorder %v394, %v395
        %v397 = vsel %vm396, %v394, %v395
        %v398 = vrot.slane %v397, 2
        %vm399 = vcmp.lt.s32.totalorder %v397, %v398
        %v400 = vsel %vm399, %v397, %v398
        %v401 = vrot.slane %v400, 1
        %vm402 = vcmp.lt.s32.totalorder %v400, %v401
        %v403 = vsel %vm402, %v400, %v401
        %vm404 = vcmp.lt.s32.totalorder %v382, %v386
        %v405 = vsel %vm404, %v382, %v386
        %vm406 = vcmp.lt.s32.totalorder %v384, %v388
        %v407 = vsel %vm406, %v384, %v388
        %vm408 = vcmp.lt.s32.totalorder %v405, %v407
        %v409 = vsel %vm408, %v405, %v407
        %v410 = vrot.slane %v409, 4
        %vm411 = vcmp.lt.s32.totalorder %v409, %v410
        %v412 = vsel %vm411, %v409, %v410
        %v413 = vrot.slane %v412, 2
        %vm414 = vcmp.lt.s32.totalorder %v412, %v413
        %v415 = vsel %vm414, %v412, %v413
        %v416 = vrot.slane %v415, 1
        %vm417 = vcmp.lt.s32.totalorder %v415, %v416
        %v418 = vsel %vm417, %v415, %v416
        %v419 = vcombine.low %v403, %v418
        %v421 = vunpack.c.l.s4 1966171168
        %v422 = vunpack.c.0.s8 %v421
        %v423 = vlaneseq
        %v424 = vshrl.u32 %v423, 7
        %v425 = vsub.s32 %v422, %v424
        %v426 = vrot.slane %v419, %v425
        %v428 = vunpack.c.l.s4 1966171168
        %v429 = vunpack.c.0.s8 %v428
        %v430 = vlaneseq
        %v431 = vshrl.u32 %v430, 7
        %v432 = vsub.s32 %v429, %v431
        %v433 = vrot.slane %v426, %v432
        %v434 = vlaneseq
        %vm435 = vcmp.ge.s32.totalorder %v434, 0
        %vm436 = vcmp.lt.s32.totalorder %v434, 256
        %vm437 = vmand %vm435, %vm436
        %438 = vst.msk [vmem:[%s188] sm:$0x3] %vm437, %v433
        %s439 = sand.u32 %s109, 1
        %s440 = scalar_lea.sflag [#allocation3], %s439
        %s441 = sand.u32 %s109, 1
        %s442 = smul.addr %s441, 2
        %s443 = scalar_lea.vmem [#allocation2], %s442
        // Predicated region
        $region33: #{tpu_custom_call.1} parent=31 // pred_check
          %p444 = pneg %p119
        $region34: #{tpu_custom_call.1} parent=31 // pred_check_branch
          %446 = sbr.rel (%p444) target = $region36
        $region35: #{tpu_custom_call.1} parent=31 // pred_region
          %s447 = smul.u32 2, %s22
          %s449 = ssub.s32 32, 32
          %450 = vsyncadd %s440, %s449
          %s451 = smul.addr %s21, 2
          %s452 = sadd.s32 %s447, %s451
          %s453 = smul.addr %s452, 16
          %s454 = scalar_lea.hbm %s3, %s453
          %s456 = sshll.u32 %s443, 4
          %s457 = int_to_ptr.vmem [resolvable:$true] %s456
          %459 = dma.vmem_to_hbm [thread:$0]  %s457, 32, %s454, %s440
        $region36: #{tpu_custom_call.1} parent=31 // pred_fallthru
          _
      $region32: #{tpu_custom_call.1} parent=5 // pred_fallthru
        _
      %p460 = scmp.le.s32.totalorder 2, %s12
      // Predicated region
      $region37: #{tpu_custom_call.1} parent=5 // pred_check
        %p461 = pneg %p460
      $region38: #{tpu_custom_call.1} parent=5 // pred_check_branch
        %463 = sbr.rel (%p461) target = $region40
      $region39: #{tpu_custom_call.1} parent=5 // pred_region
        %s464 = ssub.s32 %s12, 2
        // Predicated region
        $region41: #{tpu_custom_call.1} parent=39 // pred_check
          %p465 = pneg %p125
        $region42: #{tpu_custom_call.1} parent=39 // pred_check_branch
          %467 = sbr.rel (%p465) target = $region44
        $region43: #{tpu_custom_call.1} parent=39 // pred_region
          %s468 = sand.u32 %s110, 1
          %s469 = scalar_lea.sflag [#allocation3], %s468
          %s470 = sand.u32 %s110, 1
          %s471 = smul.addr %s470, 2
          %s472 = scalar_lea.vmem [#allocation2], %s471
          %473 = dma.done %s469, 32
        $region44: #{tpu_custom_call.1} parent=39 // pred_fallthru
          _
      $region40: #{tpu_custom_call.1} parent=5 // pred_fallthru
        _
    $region6: #{tpu_custom_call.1} parent=1 // loop_footer
      %s16 = sadd.s32 1, %s12
    $region7: #{tpu_custom_call.1} parent=1 // loop_footer_branch
      %11 = sbr.rel target = $region3
    $region8: #{tpu_custom_call.1} parent=1 // loop_exit
      _
    %474 = vsyncpa [#allocation3], 1
    %s475 = scalar_lea.sflag [#allocation3], 1
    %476 = vsyncpa %s475, 1

</llo_original>
